<compile_context>
chip_gen: v5e
topology: v5e:2x2
jax: 0.10.0
libtpu: 0.0.40
codegen_flags: <defaults>
</compile_context>

<pallas_src>
import jax
import jax.numpy as jnp
from jax.experimental import pallas as pl
from jax.experimental.pallas import tpu as pltpu

_LANES = 128
# Keep one block <= ~2 MiB so double-buffered input + (aliased) output stays
# comfortably under the 16 MiB default scoped VMEM of v5e, and far below the
# v6e/v7x limits, while being large enough (>= hundreds of KiB for real
# inputs) to amortize the ~0.35 us per-grid-step overhead.
_TARGET_BLOCK_BYTES = 2 * 1024 * 1024


def _copy_kernel(x_ref, o_ref):
    # Pure pass-through of the VMEM tile.
    o_ref[...] = x_ref[...]


def _choose_tile_rows(rows: int, lane_dim: int, itemsize: int) -> int:
    """Largest row-tile that keeps the block under the VMEM budget.

    The returned value is either the full row extent (always a legal block
    shape) or a multiple of 8 (so the (8, 128) tiling constraint holds and the
    final partial block is handled by Pallas masking).
    """
    max_rows = max(8, _TARGET_BLOCK_BYTES // (lane_dim * itemsize))
    max_rows = (max_rows // 8) * 8
    if rows <= max_rows:
        return rows
    return max_rows


def _identity_copy_2d(x2: jax.Array) -> jax.Array:
    rows, lanes = x2.shape
    tile_rows = _choose_tile_rows(rows, lanes, x2.dtype.itemsize)
    grid = (pl.cdiv(rows, tile_rows),)

    return pl.pallas_call(
        _copy_kernel,
        out_shape=jax.ShapeDtypeStruct((rows, lanes), x2.dtype),
        grid=grid,
        in_specs=[pl.BlockSpec((tile_rows, lanes), lambda i: (i, 0))],
        out_specs=pl.BlockSpec((tile_rows, lanes), lambda i: (i, 0)),
        # Identity: let XLA alias/donate the input HBM buffer to the output.
        input_output_aliases={0: 0},
        compiler_params=pltpu.CompilerParams(
            dimension_semantics=("parallel",)  # shards rows across TCs on v7x
        ),
    )(x2)


def network1_forward(x: jax.Array) -> jax.Array:
    """Pallas implementation of Network1.forward (identity)."""
    orig_shape = x.shape
    total = x.size

    if total % _LANES == 0:
        # Lane-dense layout: last dim exactly 128 -> every store is a full
        # unmasked 128-lane vst (vs. 16/128 lanes with the NCHW W axis).
        x2 = x.reshape(total // _LANES, _LANES)
    else:
        # Fallback: keep the trailing dim on the lane axis (may be masked).
        x2 = x.reshape(-1, orig_shape[-1])

    out2 = _identity_copy_2d(x2)
    return out2.reshape(orig_shape)


if __name__ == "__main__":
    key = jax.random.PRNGKey(0)
    # Small NCHW input consistent with a conv-style module: batch=2,
    # channels=4, spatial=16x16.
    x = jax.random.normal(key, (2, 4, 16, 16), dtype=jnp.float32)

    y = network1_forward(x)
    jax.block_until_ready(y)

    # Sanity check: identity semantics.
    assert y.shape == x.shape
    assert jnp.allclose(y, x)

    print("KERNEL_OK")
</pallas_src>

<mosaic_0001>
module attributes {stable_mosaic.version = 11 : i64} {
  func.func @_copy_kernel(%arg0: i32, %arg1: memref<16x128xf32, #tpu.memory_space<vmem>>, %arg2: memref<16x128xf32, #tpu.memory_space<vmem>>) attributes {dimension_semantics = [#tpu.dimension_semantics<parallel>], iteration_bounds = array<i64: 1>, scalar_prefetch = 0 : i64, scratch_operands = 0 : i64, tpu.core_type = #tpu.core_type<tc>, window_params = [{transform_indices = @transform_0, window_bounds = array<i64: 16, 128>}, {transform_indices = @transform_1, window_bounds = array<i64: 16, 128>}]} {
    %c0 = arith.constant 0 : index
    %c0_0 = arith.constant 0 : index
    %0 = vector.load %arg1[%c0, %c0_0] : memref<16x128xf32, #tpu.memory_space<vmem>>, vector<16x128xf32>
    %c0_1 = arith.constant 0 : index
    %c0_2 = arith.constant 0 : index
    %1 = vector.load %arg2[%c0_1, %c0_2] : memref<16x128xf32, #tpu.memory_space<vmem>>, vector<16x128xf32>
    tpu.vector_store %arg2[%c0_1, %c0_2], %0 {strides = array<i32>} : memref<16x128xf32, #tpu.memory_space<vmem>>, vector<16x128xf32>,
    return
  }
  func.func @transform_0(%arg0: i32) -> (i32, i32) {
    %c0_i32 = arith.constant 0 : i32
    %c0_i32_0 = arith.constant 0 : i32
    return %arg0, %c0_i32 : i32, i32
  }
  func.func @transform_1(%arg0: i32) -> (i32, i32) {
    %c0_i32 = arith.constant 0 : i32
    %c0_i32_0 = arith.constant 0 : i32
    return %arg0, %c0_i32 : i32, i32
  }
}

</mosaic_0001>

<llo_original>
// kernel: tpu_custom_call.1
$region0: #{tpu_custom_call.1}
  #allocation0 [shape = 'u32[]', space=smem, size = 0x4, offset = 0x4, fixed_abs, tag = 'smem constant byte address 0x4 - core index']
  #allocation1 [shape = 'u32[72,128]{1,0:T(1,128)}', space=vmem, size = 0x9000, scoped, tag = 'internal scratch']
  %s0 = inlined_call_operand.hbm [shape: f32[16,128], index: 0, kind: input, shape index: {}, may-alias: {0,1}]
  %s1 = inlined_call_operand.hbm [shape: f32[16,128], index: 1, kind: output, shape index: {}, may-alias: {0,1}]
  %s2 = sld [smem:[#allocation0]]
  $region18: #{tpu_custom_call.1} parent=0
    _
  %s4 = ssub.s32 1, %s2
  %s5 = scalar_select 0, %s4, %s2
  $region1: #{tpu_custom_call.1} parent=0
    #allocation2 [shape = 'u8[8192]{0}', space=vmem, size = 0x2000, scoped, tag = 'input window, operand 0, single buffered']
    #allocation3 [shape = 's32[1]{0}', space=sflag, size = 0x4, scoped, tag = 'scoped memory for tpu_custom_call.1']
    #allocation4 [shape = 's32[1]{0}', space=sflag, size = 0x4, scoped, tag = 'scoped memory for tpu_custom_call.1']
    #allocation5 [shape = 'u8[8192]{0}', space=vmem, size = 0x2000, scoped, tag = 'output window, operand 0, single buffered']
    %6 = vsyncpa [#allocation3], 0
    %7 = vsyncpa [#allocation4], 0
    // Predicated region
    $region2: #{tpu_custom_call.1} parent=1 // pred_check
      _
    $region3: #{tpu_custom_call.1} parent=1 // pred_check_branch
      %9 = sbr.rel (0) target = $region5
    $region4: #{tpu_custom_call.1} parent=1 // pred_region
      %11 = vsyncadd [#allocation3], 0
      %s12 = sshll.u32 %s0, 4
      %s13 = int_to_ptr.hbm [resolvable:$true] %s12
      %s14 = sshll.u32 [#allocation2], 4
      %s15 = int_to_ptr.vmem [resolvable:$true] %s14
      %20 = dma.hbm_to_vmem [thread:$0]  %s13, 256, %s15, [#allocation3], 128, 128, 8
    $region5: #{tpu_custom_call.1} parent=1 // pred_fallthru
      _
    // Predicated region
    $region6: #{tpu_custom_call.1} parent=1 // pred_check
      _
    $region7: #{tpu_custom_call.1} parent=1 // pred_check_branch
      %22 = sbr.rel (0) target = $region9
    $region8: #{tpu_custom_call.1} parent=1 // pred_region
      %24 = dma.done [#allocation3], 256
    $region9: #{tpu_custom_call.1} parent=1 // pred_fallthru
      _
    %v25 = vld [vmem:[#allocation2] sm:$0xff]
    %v26 = vld [vmem:[#allocation2 + $0x8] sm:$0xff]
    %27 = vst [vmem:[#allocation5] sm:$0xff] %v25
    %28 = vst [vmem:[#allocation5 + $0x8] sm:$0xff] %v26
    // Predicated region
    $region10: #{tpu_custom_call.1} parent=1 // pred_check
      _
    $region11: #{tpu_custom_call.1} parent=1 // pred_check_branch
      %30 = sbr.rel (0) target = $region13
    $region12: #{tpu_custom_call.1} parent=1 // pred_region
      %32 = vsyncadd [#allocation4], 0
      %s33 = sshll.u32 [#allocation5], 4
      %s34 = int_to_ptr.vmem [resolvable:$true] %s33
      %s35 = sshll.u32 %s1, 4
      %s36 = int_to_ptr.hbm [resolvable:$true] %s35
      %41 = dma.vmem_to_hbm [thread:$0]  %s34, 256, %s36, [#allocation4], 128, 128, 8
    $region13: #{tpu_custom_call.1} parent=1 // pred_fallthru
      _
    // Predicated region
    $region14: #{tpu_custom_call.1} parent=1 // pred_check
      _
    $region15: #{tpu_custom_call.1} parent=1 // pred_check_branch
      %43 = sbr.rel (0) target = $region17
    $region16: #{tpu_custom_call.1} parent=1 // pred_region
      %45 = dma.done [#allocation4], 256
    $region17: #{tpu_custom_call.1} parent=1 // pred_fallthru
      _
    %46 = vsyncpa [#allocation3], 1
    %47 = vsyncpa [#allocation4], 1

</llo_original>
